<compile_context>
chip_gen: v7x
topology: tpu7x:2x2x1
jax: 0.10.0
libtpu: 0.0.40
codegen_flags: <defaults>
</compile_context>

<pallas_src>
import functools

import jax
import jax.numpy as jnp
from jax import lax
from jax.experimental import pallas as pl
from jax.experimental.pallas import tpu as pltpu

_LANES = 128


def _cdiv(a, b):
    return -(-a // b)


def _asym_sums_kernel(x_ref, y_ref, tp_ref, sx_ref, cnt_ref,
                      tp_acc, sx_acc, cnt_acc, *, n_rows, needs_mask):
    """Accumulates per-class tp / sum_x / count over one (split, batch) row run."""
    split = pl.program_id(0)
    s = pl.program_id(2)
    per_split = pl.num_programs(2)

    @pl.when(s == 0)
    def _init():
        tp_acc[...] = jnp.zeros_like(tp_acc)
        sx_acc[...] = jnp.zeros_like(sx_acc)
        cnt_acc[...] = jnp.zeros_like(cnt_acc)

    xb = x_ref[0]                              # (C, Rt, 128), native dtype
    yb = y_ref[0].astype(jnp.int32)            # (1, Rt, 128)
    C, Rt, L = xb.shape

    if needs_mask:
        # Logical row-block index (the DMA index map is clamped; the mask uses
        # the *unclamped* index so out-of-range rows contribute nothing).
        rb = split * per_split + s
        r_idx = lax.broadcasted_iota(jnp.int32, (1, Rt, L), 1)
        valid = (rb * Rt + r_idx) < n_rows     # (1, Rt, 128)
        xb = jnp.where(valid, xb, jnp.zeros((), xb.dtype))
        yb = jnp.where(valid, yb, -1)

    c_idx = lax.broadcasted_iota(jnp.int32, (C, Rt, L), 0)
    mask = yb == c_idx                         # (C, Rt, 128)

    zero = jnp.zeros((), xb.dtype)
    # Reduce over the row (sublane) axis only; lane axis is reduced in finalize.
    tp_acc[...] += jnp.sum(jnp.where(mask, xb, zero).astype(jnp.float32), axis=1)
    sx_acc[...] += jnp.sum(xb.astype(jnp.float32), axis=1)
    cnt_acc[...] += jnp.sum(jnp.where(mask, 1.0, 0.0), axis=1)

    @pl.when(s == per_split - 1)
    def _finalize():
        tp_ref[...] = jnp.sum(tp_acc[...], axis=-1, keepdims=True)[None, None]
        sx_ref[...] = jnp.sum(sx_acc[...], axis=-1, keepdims=True)[None, None]
        cnt_ref[...] = jnp.sum(cnt_acc[...], axis=-1, keepdims=True)[None, None]


def asym_loss(x, y, *, smooth=1.0, beta=1.5,
              target_block_bytes=4 * 1024 * 1024):
    """AsymLoss forward (PyTorch module defaults). x: (B,C,H,W) float, y: (B,H,W) int."""
    B, C, H, W = x.shape
    S = H * W
    L = _LANES

    x_flat = x.reshape(B, C, S)
    y32 = y.astype(jnp.int32).reshape(B, S)

    n_rows = S // L
    s_main = n_rows * L
    s_tail = S - s_main

    if n_rows > 0:
        x_bytes = x.dtype.itemsize
        # int8 labels only when the block row-tiling is guaranteed 32-aligned
        # (or full-extent); tiny inputs just use int32 (traffic irrelevant).
        use_int8 = (C <= 127) and (n_rows >= 32)
        y_wire_dtype = jnp.int8 if use_int8 else jnp.int32
        y_bytes = jnp.dtype(y_wire_dtype).itemsize

        # ---- row-tile (sublane) sizing from a per-step VMEM byte budget ----
        raw = max(8, target_block_bytes // (C * L * x_bytes))
        rt_budget = (raw // 32) * 32 if raw >= 32 else (raw // 8) * 8
        if n_rows <= 32:
            rt = n_rows                        # single full-extent row block
        else:
            half = _cdiv(_cdiv(n_rows, 2), 32) * 32
            rt = min(rt_budget, half)          # >= 2 blocks so the split helps
        num_rb = _cdiv(n_rows, rt)
        nsplit = 2 if num_rb >= 2 else 1       # megacore coverage even at B == 1
        per_split = _cdiv(num_rb, nsplit)
        needs_mask = (nsplit * per_split * rt) != n_rows

        # ---- pack spatial dim as (rows, 128): full vregs even for C < 8 ----
        x_main = x_flat[:, :, :s_main] if s_tail else x_flat
        y_main = y32[:, :s_main] if s_tail else y32
        x_pk = x_main.reshape(B, C, n_rows, L)
        y_pk = y_main.astype(y_wire_dtype).reshape(B, 1, n_rows, L)

        last_rb = num_rb - 1
        def io_map(split, b, s):
            rb = jnp.minimum(split * per_split + s, last_rb)
            return (b, 0, rb, 0)

        out_map = lambda split, b, s: (split, b, 0, 0)
        out_sds = jax.ShapeDtypeStruct((nsplit, B, C, 1), jnp.float32)
        out_spec = pl.BlockSpec((1, 1, C, 1), out_map)

        x_blk = C * rt * L * x_bytes
        y_blk = rt * L * y_bytes
        acc_bytes = 3 * C * L * 4
        vmem_limit = max(2 * (x_blk + y_blk) + acc_bytes + (8 << 20), 16 << 20)

        kernel = functools.partial(_asym_sums_kernel,
                                   n_rows=n_rows, needs_mask=needs_mask)

        tp_p, sx_p, cnt_p = pl.pallas_call(
            kernel,
            out_shape=(out_sds, out_sds, out_sds),
            grid_spec=pltpu.PrefetchScalarGridSpec(
                num_scalar_prefetch=0,
                grid=(nsplit, B, per_split),
                in_specs=[
                    pl.BlockSpec((1, C, rt, L), io_map),
                    pl.BlockSpec((1, 1, rt, L), io_map),
                ],
                out_specs=(out_spec, out_spec, out_spec),
                scratch_shapes=[
                    pltpu.VMEM((C, L), jnp.float32),   # tp accumulator
                    pltpu.VMEM((C, L), jnp.float32),   # sum_x accumulator
                    pltpu.VMEM((C, L), jnp.float32),   # count accumulator
                ],
            ),
            compiler_params=pltpu.CompilerParams(
                dimension_semantics=("parallel", "parallel", "arbitrary"),
                vmem_limit_bytes=int(vmem_limit),
            ),
        )(x_pk, y_pk)

        tp = jnp.sum(tp_p[..., 0], axis=0)     # (B, C)
        sx = jnp.sum(sx_p[..., 0], axis=0)
        cnt = jnp.sum(cnt_p[..., 0], axis=0)
    else:
        tp = jnp.zeros((B, C), jnp.float32)
        sx = jnp.zeros((B, C), jnp.float32)
        cnt = jnp.zeros((B, C), jnp.float32)

    if s_tail:
        # Ragged (< 128 element) spatial tail: tiny, handled in plain JAX so x
        # never needs a padded HBM copy.
        x_t = x_flat[:, :, s_main:].astype(jnp.float32)               # (B, C, T)
        y_t = y32[:, s_main:]                                         # (B, T)
        oh = y_t[:, None, :] == jnp.arange(C, dtype=jnp.int32)[None, :, None]
        tp = tp + jnp.sum(jnp.where(oh, x_t, 0.0), axis=-1)
        sx = sx + jnp.sum(x_t, axis=-1)
        cnt = cnt + jnp.sum(oh.astype(jnp.float32), axis=-1)

    fp = sx - tp
    fn = cnt - tp
    w = (beta * beta) / (1.0 + beta * beta)
    asym = (tp + smooth) / (tp + w * fn + (1.0 - w) * fp + smooth)
    # do_bg=True, batch_dice=False -> mean over (b, c).
    return -jnp.mean(asym)


def _asym_loss_ref(x, y, smooth=1.0, beta=1.5):
    """Pure-JAX reference matching the PyTorch AsymLoss forward (defaults)."""
    B, C, H, W = x.shape
    xf = x.astype(jnp.float32)
    onehot = jax.nn.one_hot(y, C, axis=1, dtype=jnp.float32)          # (B, C, H, W)
    tp = jnp.sum(xf * onehot, axis=(2, 3))
    fp = jnp.sum(xf * (1.0 - onehot), axis=(2, 3))
    fn = jnp.sum((1.0 - xf) * onehot, axis=(2, 3))
    w = beta ** 2 / (1.0 + beta ** 2)
    asym = (tp + smooth) / (tp + w * fn + (1.0 - w) * fp + smooth)
    return -jnp.mean(asym)


if __name__ == "__main__":
    key = jax.random.PRNGKey(0)

    def _run_case(shape, **kw):
        b, c, h, w = shape
        kx, ky = jax.random.split(jax.random.fold_in(key, h * w * c))
        x = jax.random.uniform(kx, (b, c, h, w), dtype=jnp.float32)
        y = jax.random.randint(ky, (b, h, w), 0, c, dtype=jnp.int32)
        got = jax.block_until_ready(asym_loss(x, y, **kw))
        want = jax.block_until_ready(_asym_loss_ref(x, y))
        assert jnp.allclose(got, want, rtol=1e-4, atol=1e-5), (shape, got, want)

    # Primary small case (B=2, C=4, H=W=16).
    _run_case((2, 4, 16, 16))
    # Ragged spatial size (H*W % 128 != 0): exercises the JAX tail epilogue.
    _run_case((2, 4, 16, 17))
    # Forces multiple / partial / clamped row blocks, in-kernel tail masking,
    # int8 labels and the 2-way spatial split across "parallel" grid axes.
    _run_case((2, 4, 65, 128), target_block_bytes=64 * 1024)

    print("KERNEL_OK")
</pallas_src>

<mosaic_0001>
module attributes {stable_mosaic.version = 11 : i64} {
  func.func @_asym_sums_kernel(%arg0: i32, %arg1: i32, %arg2: i32, %arg3: memref<1x4x2x128xf32, #tpu.memory_space<vmem>>, %arg4: memref<1x1x2x128xi32, #tpu.memory_space<vmem>>, %arg5: memref<1x1x4x1xf32, #tpu.memory_space<vmem>>, %arg6: memref<1x1x4x1xf32, #tpu.memory_space<vmem>>, %arg7: memref<1x1x4x1xf32, #tpu.memory_space<vmem>>, %arg8: memref<4x128xf32, #tpu.memory_space<vmem>>, %arg9: memref<4x128xf32, #tpu.memory_space<vmem>>, %arg10: memref<4x128xf32, #tpu.memory_space<vmem>>) attributes {dimension_semantics = [#tpu.dimension_semantics<parallel>, #tpu.dimension_semantics<parallel>, #tpu.dimension_semantics<arbitrary>], iteration_bounds = array<i64: 1, 2, 1>, scalar_prefetch = 0 : i64, scratch_operands = 3 : i64, tpu.core_type = #tpu.core_type<tc>, window_params = [{transform_indices = @transform_0, window_bounds = array<i64: 1, 4, 2, 128>}, {transform_indices = @transform_1, window_bounds = array<i64: 1, 1, 2, 128>}, {transform_indices = @transform_2, window_bounds = array<i64: 1, 1, 4, 1>}, {transform_indices = @transform_3, window_bounds = array<i64: 1, 1, 4, 1>}, {transform_indices = @transform_4, window_bounds = array<i64: 1, 1, 4, 1>}]} {
    %c0_i32 = arith.constant 0 : i32
    %0 = arith.cmpi eq, %arg2, %c0_i32 : i32
    %1 = arith.extui %0 : i1 to i32
    %c0_i32_0 = arith.constant 0 : i32
    %2 = arith.cmpi ne, %1, %c0_i32_0 : i32
    scf.if %2 {
      %cst_27 = arith.constant 0.000000e+00 : f32
      %30 = vector.broadcast %cst_27 : f32 to vector<4x128xf32>
      %c0_28 = arith.constant 0 : index
      %c0_29 = arith.constant 0 : index
      %31 = vector.load %arg8[%c0_28, %c0_29] : memref<4x128xf32, #tpu.memory_space<vmem>>, vector<4x128xf32>
      tpu.vector_store %arg8[%c0_28, %c0_29], %30 {strides = array<i32>} : memref<4x128xf32, #tpu.memory_space<vmem>>, vector<4x128xf32>,
      %cst_30 = arith.constant 0.000000e+00 : f32
      %32 = vector.broadcast %cst_30 : f32 to vector<4x128xf32>
      %c0_31 = arith.constant 0 : index
      %c0_32 = arith.constant 0 : index
      %33 = vector.load %arg9[%c0_31, %c0_32] : memref<4x128xf32, #tpu.memory_space<vmem>>, vector<4x128xf32>
      tpu.vector_store %arg9[%c0_31, %c0_32], %32 {strides = array<i32>} : memref<4x128xf32, #tpu.memory_space<vmem>>, vector<4x128xf32>,
      %cst_33 = arith.constant 0.000000e+00 : f32
      %34 = vector.broadcast %cst_33 : f32 to vector<4x128xf32>
      %c0_34 = arith.constant 0 : index
      %c0_35 = arith.constant 0 : index
      %35 = vector.load %arg10[%c0_34, %c0_35] : memref<4x128xf32, #tpu.memory_space<vmem>>, vector<4x128xf32>
      tpu.vector_store %arg10[%c0_34, %c0_35], %34 {strides = array<i32>} : memref<4x128xf32, #tpu.memory_space<vmem>>, vector<4x128xf32>,
    } else {
    }
    %c0 = arith.constant 0 : index
    %c0_1 = arith.constant 0 : index
    %c0_2 = arith.constant 0 : index
    %c0_3 = arith.constant 0 : index
    %3 = vector.load %arg3[%c0, %c0_1, %c0_2, %c0_3] : memref<1x4x2x128xf32, #tpu.memory_space<vmem>>, vector<1x4x2x128xf32>
    %4 = vector.shape_cast %3 : vector<1x4x2x128xf32> to vector<4x2x128xf32>
    %c0_4 = arith.constant 0 : index
    %c0_5 = arith.constant 0 : index
    %c0_6 = arith.constant 0 : index
    %c0_7 = arith.constant 0 : index
    %5 = vector.load %arg4[%c0_4, %c0_5, %c0_6, %c0_7] : memref<1x1x2x128xi32, #tpu.memory_space<vmem>>, vector<1x1x2x128xi32>
    %6 = vector.shape_cast %5 : vector<1x1x2x128xi32> to vector<1x2x128xi32>
    %7 = tpu.iota {dimensions = array<i32: 0>} : vector<4x2x128xi32>
    %8 = vector.broadcast %6 : vector<1x2x128xi32> to vector<4x2x128xi32>
    %9 = arith.cmpi eq, %8, %7 : vector<4x2x128xi32>
    %c0_8 = arith.constant 0 : index
    %c0_9 = arith.constant 0 : index
    %10 = vector.load %arg8[%c0_8, %c0_9] : memref<4x128xf32, #tpu.memory_space<vmem>>, vector<4x128xf32>
    %cst = arith.constant 0.000000e+00 : f32
    %11 = vector.broadcast %cst : f32 to vector<4x2x128xf32>
    %12 = arith.select %9, %4, %11 : vector<4x2x128xi1>, vector<4x2x128xf32>
    %cst_10 = arith.constant dense<0.000000e+00> : vector<4x128xf32>
    %13 = vector.multi_reduction <add>, %12, %cst_10 [1] : vector<4x2x128xf32> to vector<4x128xf32>
    %14 = arith.addf %10, %13 : vector<4x128xf32>
    %c0_11 = arith.constant 0 : index
    %c0_12 = arith.constant 0 : index
    %15 = vector.load %arg8[%c0_11, %c0_12] : memref<4x128xf32, #tpu.memory_space<vmem>>, vector<4x128xf32>
    tpu.vector_store %arg8[%c0_11, %c0_12], %14 {strides = array<i32>} : memref<4x128xf32, #tpu.memory_space<vmem>>, vector<4x128xf32>,
    %c0_13 = arith.constant 0 : index
    %c0_14 = arith.constant 0 : index
    %16 = vector.load %arg9[%c0_13, %c0_14] : memref<4x128xf32, #tpu.memory_space<vmem>>, vector<4x128xf32>
    %cst_15 = arith.constant dense<0.000000e+00> : vector<4x128xf32>
    %17 = vector.multi_reduction <add>, %4, %cst_15 [1] : vector<4x2x128xf32> to vector<4x128xf32>
    %18 = arith.addf %16, %17 : vector<4x128xf32>
    %c0_16 = arith.constant 0 : index
    %c0_17 = arith.constant 0 : index
    %19 = vector.load %arg9[%c0_16, %c0_17] : memref<4x128xf32, #tpu.memory_space<vmem>>, vector<4x128xf32>
    tpu.vector_store %arg9[%c0_16, %c0_17], %18 {strides = array<i32>} : memref<4x128xf32, #tpu.memory_space<vmem>>, vector<4x128xf32>,
    %c0_18 = arith.constant 0 : index
    %c0_19 = arith.constant 0 : index
    %20 = vector.load %arg10[%c0_18, %c0_19] : memref<4x128xf32, #tpu.memory_space<vmem>>, vector<4x128xf32>
    %cst_20 = arith.constant 1.000000e+00 : f32
    %cst_21 = arith.constant 0.000000e+00 : f32
    %21 = vector.broadcast %cst_20 : f32 to vector<4x2x128xf32>
    %22 = vector.broadcast %cst_21 : f32 to vector<4x2x128xf32>
    %23 = arith.select %9, %21, %22 : vector<4x2x128xi1>, vector<4x2x128xf32>
    %cst_22 = arith.constant dense<0.000000e+00> : vector<4x128xf32>
    %24 = vector.multi_reduction <add>, %23, %cst_22 [1] : vector<4x2x128xf32> to vector<4x128xf32>
    %25 = arith.addf %20, %24 : vector<4x128xf32>
    %c0_23 = arith.constant 0 : index
    %c0_24 = arith.constant 0 : index
    %26 = vector.load %arg10[%c0_23, %c0_24] : memref<4x128xf32, #tpu.memory_space<vmem>>, vector<4x128xf32>
    tpu.vector_store %arg10[%c0_23, %c0_24], %25 {strides = array<i32>} : memref<4x128xf32, #tpu.memory_space<vmem>>, vector<4x128xf32>,
    %c0_i32_25 = arith.constant 0 : i32
    %27 = arith.cmpi eq, %arg2, %c0_i32_25 : i32
    %28 = arith.extui %27 : i1 to i32
    %c0_i32_26 = arith.constant 0 : i32
    %29 = arith.cmpi ne, %28, %c0_i32_26 : i32
    scf.if %29 {
      %c0_27 = arith.constant 0 : index
      %c0_28 = arith.constant 0 : index
      %30 = vector.load %arg8[%c0_27, %c0_28] : memref<4x128xf32, #tpu.memory_space<vmem>>, vector<4x128xf32>
      %cst_29 = arith.constant dense<0.000000e+00> : vector<4xf32>
      %31 = vector.multi_reduction <add>, %30, %cst_29 [1] : vector<4x128xf32> to vector<4xf32>
      %32 = vector.shape_cast %31 : vector<4xf32> to vector<4x1xf32>
      %33 = vector.shape_cast %32 : vector<4x1xf32> to vector<1x1x4x1xf32>
      %c0_30 = arith.constant 0 : index
      %c0_31 = arith.constant 0 : index
      %c0_32 = arith.constant 0 : index
      %c0_33 = arith.constant 0 : index
      %34 = vector.load %arg5[%c0_30, %c0_31, %c0_32, %c0_33] : memref<1x1x4x1xf32, #tpu.memory_space<vmem>>, vector<1x1x4x1xf32>
      tpu.vector_store %arg5[%c0_30, %c0_31, %c0_32, %c0_33], %33 {strides = array<i32>} : memref<1x1x4x1xf32, #tpu.memory_space<vmem>>, vector<1x1x4x1xf32>,
      %c0_34 = arith.constant 0 : index
      %c0_35 = arith.constant 0 : index
      %35 = vector.load %arg9[%c0_34, %c0_35] : memref<4x128xf32, #tpu.memory_space<vmem>>, vector<4x128xf32>
      %cst_36 = arith.constant dense<0.000000e+00> : vector<4xf32>
      %36 = vector.multi_reduction <add>, %35, %cst_36 [1] : vector<4x128xf32> to vector<4xf32>
      %37 = vector.shape_cast %36 : vector<4xf32> to vector<4x1xf32>
      %38 = vector.shape_cast %37 : vector<4x1xf32> to vector<1x1x4x1xf32>
      %c0_37 = arith.constant 0 : index
      %c0_38 = arith.constant 0 : index
      %c0_39 = arith.constant 0 : index
      %c0_40 = arith.constant 0 : index
      %39 = vector.load %arg6[%c0_37, %c0_38, %c0_39, %c0_40] : memref<1x1x4x1xf32, #tpu.memory_space<vmem>>, vector<1x1x4x1xf32>
      tpu.vector_store %arg6[%c0_37, %c0_38, %c0_39, %c0_40], %38 {strides = array<i32>} : memref<1x1x4x1xf32, #tpu.memory_space<vmem>>, vector<1x1x4x1xf32>,
      %c0_41 = arith.constant 0 : index
      %c0_42 = arith.constant 0 : index
      %40 = vector.load %arg10[%c0_41, %c0_42] : memref<4x128xf32, #tpu.memory_space<vmem>>, vector<4x128xf32>
      %cst_43 = arith.constant dense<0.000000e+00> : vector<4xf32>
      %41 = vector.multi_reduction <add>, %40, %cst_43 [1] : vector<4x128xf32> to vector<4xf32>
      %42 = vector.shape_cast %41 : vector<4xf32> to vector<4x1xf32>
      %43 = vector.shape_cast %42 : vector<4x1xf32> to vector<1x1x4x1xf32>
      %c0_44 = arith.constant 0 : index
      %c0_45 = arith.constant 0 : index
      %c0_46 = arith.constant 0 : index
      %c0_47 = arith.constant 0 : index
      %44 = vector.load %arg7[%c0_44, %c0_45, %c0_46, %c0_47] : memref<1x1x4x1xf32, #tpu.memory_space<vmem>>, vector<1x1x4x1xf32>
      tpu.vector_store %arg7[%c0_44, %c0_45, %c0_46, %c0_47], %43 {strides = array<i32>} : memref<1x1x4x1xf32, #tpu.memory_space<vmem>>, vector<1x1x4x1xf32>,
    } else {
    }
    return
  }
  func.func @transform_0(%arg0: i32, %arg1: i32, %arg2: i32) -> (i32, i32, i32, i32) {
    %c1_i32 = arith.constant 1 : i32
    %0 = arith.muli %arg0, %c1_i32 : i32
    %1 = arith.addi %0, %arg2 : i32
    %c0_i32 = arith.constant 0 : i32
    %2 = arith.minsi %1, %c0_i32 : i32
    %c0_i32_0 = arith.constant 0 : i32
    %c0_i32_1 = arith.constant 0 : i32
    %c0_i32_2 = arith.constant 0 : i32
    return %arg1, %c0_i32_0, %2, %c0_i32_1 : i32, i32, i32, i32
  }
  func.func @transform_1(%arg0: i32, %arg1: i32, %arg2: i32) -> (i32, i32, i32, i32) {
    %c1_i32 = arith.constant 1 : i32
    %0 = arith.muli %arg0, %c1_i32 : i32
    %1 = arith.addi %0, %arg2 : i32
    %c0_i32 = arith.constant 0 : i32
    %2 = arith.minsi %1, %c0_i32 : i32
    %c0_i32_0 = arith.constant 0 : i32
    %c0_i32_1 = arith.constant 0 : i32
    %c0_i32_2 = arith.constant 0 : i32
    return %arg1, %c0_i32_0, %2, %c0_i32_1 : i32, i32, i32, i32
  }
  func.func @transform_2(%arg0: i32, %arg1: i32, %arg2: i32) -> (i32, i32, i32, i32) {
    %c0_i32 = arith.constant 0 : i32
    %c0_i32_0 = arith.constant 0 : i32
    %c0_i32_1 = arith.constant 0 : i32
    return %arg0, %arg1, %c0_i32, %c0_i32_0 : i32, i32, i32, i32
  }
  func.func @transform_3(%arg0: i32, %arg1: i32, %arg2: i32) -> (i32, i32, i32, i32) {
    %c0_i32 = arith.constant 0 : i32
    %c0_i32_0 = arith.constant 0 : i32
    %c0_i32_1 = arith.constant 0 : i32
    return %arg0, %arg1, %c0_i32, %c0_i32_0 : i32, i32, i32, i32
  }
  func.func @transform_4(%arg0: i32, %arg1: i32, %arg2: i32) -> (i32, i32, i32, i32) {
    %c0_i32 = arith.constant 0 : i32
    %c0_i32_0 = arith.constant 0 : i32
    %c0_i32_1 = arith.constant 0 : i32
    return %arg0, %arg1, %c0_i32, %c0_i32_0 : i32, i32, i32, i32
  }
}

</mosaic_0001>

<llo_original>
// kernel: tpu_custom_call.1
$region0: #{tpu_custom_call.1}
  #allocation0 [shape = 'u32[]', space=smem, size = 0x4, offset = 0x4, fixed_abs, tag = 'smem constant byte address 0x4 - core index']
  #allocation1 [shape = 'u32[144,128]{1,0:T(1,128)}', space=vmem, size = 0x12000, scoped, tag = 'internal scratch']
  #allocation2 [shape = 'f32[4,128]{1,0:T(4,128)}', space=vmem, size = 0x800, scoped, tag = 'scratch operand']
  #allocation3 [shape = 'f32[4,128]{1,0:T(4,128)}', space=vmem, size = 0x800, scoped, tag = 'scratch operand']
  #allocation4 [shape = 'f32[4,128]{1,0:T(4,128)}', space=vmem, size = 0x800, scoped, tag = 'scratch operand']
  %s0 = inlined_call_operand.hbm [shape: f32[2,4,2,128], index: 0, kind: input, shape index: {}]
  %s1 = inlined_call_operand.hbm [shape: s32[2,1,2,128], index: 1, kind: input, shape index: {}]
  %s2 = inlined_call_operand.vmem [shape: f32[1,2,4,1], index: 2, kind: output, shape index: {0}]
  %s3 = inlined_call_operand.vmem [shape: f32[1,2,4,1], index: 3, kind: output, shape index: {1}]
  %s4 = inlined_call_operand.vmem [shape: f32[1,2,4,1], index: 4, kind: output, shape index: {2}]
  %5 = xla_tuple %s2, %s3, %s4
  %s6 = sld [smem:[#allocation0]]
  $region73: #{tpu_custom_call.1} parent=0
    _
  %s8 = ssub.s32 1, %s6
  %s9 = scalar_select 0, %s8, %s6
  $region1: #{tpu_custom_call.1} parent=0
    #allocation5 [shape = 'u8[8192]{0}', space=vmem, size = 0x2000, scoped, tag = 'input window, operand 0']
    #allocation6 [shape = 's32[2]{0}', space=sflag, size = 0x8, scoped, tag = 'scoped memory for tpu_custom_call.1']
    #allocation7 [shape = 'u8[2048]{0}', space=vmem, size = 0x800, scoped, tag = 'input window, operand 1']
    #allocation8 [shape = 's32[2]{0}', space=sflag, size = 0x8, scoped, tag = 'scoped memory for tpu_custom_call.1']
    %10 = vsyncpa [#allocation6], 0
    %s11 = scalar_lea.sflag [#allocation6], 1
    %12 = vsyncpa %s11, 0
    %13 = vsyncpa [#allocation8], 0
    %s14 = scalar_lea.sflag [#allocation8], 1
    %15 = vsyncpa %s14, 0
    loop: start=0, step=1, limit=4
    $region2: #{tpu_custom_call.1} parent=1 // loop_pre_header
      _
    $region3: #{tpu_custom_call.1} parent=1 // loop_header
      %s17 = sphi 0, %s21
      %p18 = scmp.ge.s32.totalorder %s17, 4
      %s24 = sphi 0, %s43
      %s25 = sphi 0, %s39
      %s26 = sphi 0, %s35
      %s27 = sphi 0, %s24
      %s28 = sphi 0, %s25
      %s29 = sphi 0, %s26
      %s30 = sphi 0, %s27
      %s31 = sphi 0, %s28
      %s32 = sphi 0, %s29
      %s54 = sphi 0, %s56
      %s57 = sphi 0, %s54
      %s58 = sphi 0, %s57
      %s74 = sphi 0, %s58
      %s88 = sphi 0, %s90
      %s91 = sphi 0, %s88
      %s92 = sphi 0, %s91
      %s108 = sphi 0, %s92
      %s116 = sphi 0, %s118
      %s119 = sphi 0, %s116
      %s120 = sphi 0, %s119
      %s136 = sphi 0, %s120
      %s144 = sphi 0, %s146
      %s147 = sphi 0, %s144
      %s148 = sphi 0, %s147
      %s164 = sphi 0, %s148
      %s172 = sphi 0, %s174
      %s175 = sphi 0, %s172
      %s176 = sphi 0, %s175
      %s192 = sphi 0, %s176
    $region4: #{tpu_custom_call.1} parent=1 // loop_header_branch
      %20 = sbr.rel (%p18) target = $region8
    $region5: #{tpu_custom_call.1} parent=1 // loop_body
      %s22 = ssub.s32 %s17, 1
      %s23 = ssub.s32 %s17, 2
      %s33 = sadd.s32 1, %s26
      %p34 = scmp.ge.s32.totalorder %s33, 1
      %s35 = scalar_select %p34, 0, %s33
      %s36 = sadd.s32 1, %s25
      %s37 = scalar_select %p34, %s36, %s25
      %p38 = scmp.ge.s32.totalorder %s37, 2
      %s39 = scalar_select %p38, 0, %s37
      %s40 = sadd.s32 1, %s24
      %s41 = scalar_select %p38, %s40, %s24
      %p42 = scmp.ge.s32.totalorder %s41, 1
      %s43 = scalar_select %p42, 0, %s41
      %s44 = sadd.s32 %s24, %s26
      %p45 = scmp.lt.s32.totalorder %s44, 0
      %s46 = scalar_select %p45, %s44, 0
      %s47 = sadd.s32 %s43, %s35
      %p48 = scmp.lt.s32.totalorder %s47, 0
      %s49 = scalar_select %p48, %s47, 0
      %s50 = ssub.s32 %s25, %s39
      %s51 = ssub.s32 %s46, %s49
      %s52 = sor.u32 %s50, %s51
      %p53 = scmp.eq.s32.totalorder %s52, 0
      %s55 = sadd.s32 %s54, 1
      %s56 = scalar_select %p53, %s54, %s55
      %p59 = pneg %p53
      %p60 = scmp.eq.s32.totalorder %s17, 1
      %p61 = por %p59, %p60
      %p62 = scmp.ne.s32.totalorder %s54, %s57
      %p63 = scmp.eq.s32.totalorder %s17, 0
      %p64 = por %p62, %p63
      %p65 = scmp.ne.s32.totalorder %s54, %s57
      %p66 = scmp.eq.s32.totalorder %s22, 1
      %p67 = por %p65, %p66
      %p68 = scmp.ne.s32.totalorder %s57, %s58
      %p69 = scmp.eq.s32.totalorder %s22, 0
      %p70 = por %p68, %p69
      %p71 = scmp.ne.s32.totalorder %s57, %s58
      %p72 = scmp.eq.s32.totalorder %s23, 1
      %p73 = por %p71, %p72
      %p75 = scmp.ne.s32.totalorder %s58, %s74
      %p76 = scmp.eq.s32.totalorder %s23, 0
      %p77 = por %p75, %p76
      %s78 = sadd.s32 %s24, %s26
      %p79 = scmp.lt.s32.totalorder %s78, 0
      %s80 = scalar_select %p79, %s78, 0
      %s81 = sadd.s32 %s43, %s35
      %p82 = scmp.lt.s32.totalorder %s81, 0
      %s83 = scalar_select %p82, %s81, 0
      %s84 = ssub.s32 %s25, %s39
      %s85 = ssub.s32 %s80, %s83
      %s86 = sor.u32 %s84, %s85
      %p87 = scmp.eq.s32.totalorder %s86, 0
      %s89 = sadd.s32 %s88, 1
      %s90 = scalar_select %p87, %s88, %s89
      %p93 = pneg %p87
      %p94 = scmp.eq.s32.totalorder %s17, 1
      %p95 = por %p93, %p94
      %p96 = scmp.ne.s32.totalorder %s88, %s91
      %p97 = scmp.eq.s32.totalorder %s17, 0
      %p98 = por %p96, %p97
      %p99 = scmp.ne.s32.totalorder %s88, %s91
      %p100 = scmp.eq.s32.totalorder %s22, 1
      %p101 = por %p99, %p100
      %p102 = scmp.ne.s32.totalorder %s91, %s92
      %p103 = scmp.eq.s32.totalorder %s22, 0
      %p104 = por %p102, %p103
      %p105 = scmp.ne.s32.totalorder %s91, %s92
      %p106 = scmp.eq.s32.totalorder %s23, 1
      %p107 = por %p105, %p106
      %p109 = scmp.ne.s32.totalorder %s92, %s108
      %p110 = scmp.eq.s32.totalorder %s23, 0
      %p111 = por %p109, %p110
      %s112 = ssub.s32 %s24, %s43
      %s113 = ssub.s32 %s25, %s39
      %s114 = sor.u32 %s112, %s113
      %p115 = scmp.eq.s32.totalorder %s114, 0
      %s117 = sadd.s32 %s116, 1
      %s118 = scalar_select %p115, %s116, %s117
      %p121 = pneg %p115
      %p122 = scmp.eq.s32.totalorder %s17, 1
      %p123 = por %p121, %p122
      %p124 = scmp.ne.s32.totalorder %s116, %s119
      %p125 = scmp.eq.s32.totalorder %s17, 0
      %p126 = por %p124, %p125
      %p127 = scmp.ne.s32.totalorder %s116, %s119
      %p128 = scmp.eq.s32.totalorder %s22, 1
      %p129 = por %p127, %p128
      %p130 = scmp.ne.s32.totalorder %s119, %s120
      %p131 = scmp.eq.s32.totalorder %s22, 0
      %p132 = por %p130, %p131
      %p133 = scmp.ne.s32.totalorder %s119, %s120
      %p134 = scmp.eq.s32.totalorder %s23, 1
      %p135 = por %p133, %p134
      %p137 = scmp.ne.s32.totalorder %s120, %s136
      %p138 = scmp.eq.s32.totalorder %s23, 0
      %p139 = por %p137, %p138
      %s140 = ssub.s32 %s24, %s43
      %s141 = ssub.s32 %s25, %s39
      %s142 = sor.u32 %s140, %s141
      %p143 = scmp.eq.s32.totalorder %s142, 0
      %s145 = sadd.s32 %s144, 1
      %s146 = scalar_select %p143, %s144, %s145
      %p149 = pneg %p143
      %p150 = scmp.eq.s32.totalorder %s17, 1
      %p151 = por %p149, %p150
      %p152 = scmp.ne.s32.totalorder %s144, %s147
      %p153 = scmp.eq.s32.totalorder %s17, 0
      %p154 = por %p152, %p153
      %p155 = scmp.ne.s32.totalorder %s144, %s147
      %p156 = scmp.eq.s32.totalorder %s22, 1
      %p157 = por %p155, %p156
      %p158 = scmp.ne.s32.totalorder %s147, %s148
      %p159 = scmp.eq.s32.totalorder %s22, 0
      %p160 = por %p158, %p159
      %p161 = scmp.ne.s32.totalorder %s147, %s148
      %p162 = scmp.eq.s32.totalorder %s23, 1
      %p163 = por %p161, %p162
      %p165 = scmp.ne.s32.totalorder %s148, %s164
      %p166 = scmp.eq.s32.totalorder %s23, 0
      %p167 = por %p165, %p166
      %s168 = ssub.s32 %s24, %s43
      %s169 = ssub.s32 %s25, %s39
      %s170 = sor.u32 %s168, %s169
      %p171 = scmp.eq.s32.totalorder %s170, 0
      %s173 = sadd.s32 %s172, 1
      %s174 = scalar_select %p171, %s172, %s173
      %p177 = pneg %p171
      %p178 = scmp.eq.s32.totalorder %s17, 1
      %p179 = por %p177, %p178
      %p180 = scmp.ne.s32.totalorder %s172, %s175
      %p181 = scmp.eq.s32.totalorder %s17, 0
      %p182 = por %p180, %p181
      %p183 = scmp.ne.s32.totalorder %s172, %s175
      %p184 = scmp.eq.s32.totalorder %s22, 1
      %p185 = por %p183, %p184
      %p186 = scmp.ne.s32.totalorder %s175, %s176
      %p187 = scmp.eq.s32.totalorder %s22, 0
      %p188 = por %p186, %p187
      %p189 = scmp.ne.s32.totalorder %s175, %s176
      %p190 = scmp.eq.s32.totalorder %s23, 1
      %p191 = por %p189, %p190
      %p193 = scmp.ne.s32.totalorder %s176, %s192
      %p194 = scmp.eq.s32.totalorder %s23, 0
      %p195 = por %p193, %p194
      %p196 = scmp.le.s32.totalorder 1, %s17
      %p197 = scmp.lt.s32.totalorder %s17, 3
      %p198 = pnand %p196, %p197
      %p199 = pneg %p198
      // Predicated region
      $region9: #{tpu_custom_call.1} parent=5 // pred_check
        _
      $region10: #{tpu_custom_call.1} parent=5 // pred_check_branch
        %201 = sbr.rel (%p198) target = $region12
      $region11: #{tpu_custom_call.1} parent=5 // pred_region
        %s202 = ssub.s32 %s17, 1
      $region12: #{tpu_custom_call.1} parent=5 // pred_fallthru
        _
      %p203 = scmp.lt.s32.totalorder %s17, 2
      // Predicated region
      $region13: #{tpu_custom_call.1} parent=5 // pred_check
        %p204 = pneg %p203
      $region14: #{tpu_custom_call.1} parent=5 // pred_check_branch
        %206 = sbr.rel (%p204) target = $region16
      $region15: #{tpu_custom_call.1} parent=5 // pred_region
        // Predicated region
        $region17: #{tpu_custom_call.1} parent=15 // pred_check
          %p207 = pneg %p64
        $region18: #{tpu_custom_call.1} parent=15 // pred_check_branch
          %209 = sbr.rel (%p207) target = $region20
        $region19: #{tpu_custom_call.1} parent=15 // pred_region
          %s210 = sand.u32 %s54, 1
          %s211 = scalar_lea.sflag [#allocation6], %s210
          %s212 = sand.u32 %s54, 1
          %s213 = smul.addr %s212, 8
          %s214 = scalar_lea.vmem [#allocation5], %s213
          %s215 = sadd.s32 %s24, %s26
          %p216 = scmp.lt.s32.totalorder %s215, 0
          %s217 = scalar_select %p216, %s215, 0
          %s219 = ssub.s32 128, 128
          %220 = vsyncadd %s211, %s219
          %s221 = smul.addr %s25, 4
          %s222 = sadd.s32 %s217, %s221
          %s223 = smul.addr %s222, 32
          %s224 = scalar_lea.hbm %s0, %s223
          %s225 = sshll.u32 %s214, 4
          %s226 = int_to_ptr.vmem [resolvable:$true] %s225
          %231 = dma.hbm_to_vmem [thread:$0]  %s224, 128, %s226, %s211, 32, 32, 2
        $region20: #{tpu_custom_call.1} parent=15 // pred_fallthru
          _
        // Predicated region
        $region21: #{tpu_custom_call.1} parent=15 // pred_check
          %p232 = pneg %p98
        $region22: #{tpu_custom_call.1} parent=15 // pred_check_branch
          %234 = sbr.rel (%p232) target = $region24
        $region23: #{tpu_custom_call.1} parent=15 // pred_region
          %s235 = sand.u32 %s88, 1
          %s236 = scalar_lea.sflag [#allocation8], %s235
          %s237 = sand.u32 %s88, 1
          %s238 = smul.addr %s237, 2
          %s239 = scalar_lea.vmem [#allocation7], %s238
          %s240 = sadd.s32 %s24, %s26
          %p241 = scmp.lt.s32.totalorder %s240, 0
          %s242 = scalar_select %p241, %s240, 0
          %s244 = ssub.s32 32, 32
          %245 = vsyncadd %s236, %s244
          %s246 = sadd.s32 %s242, %s25
          %s247 = smul.addr %s246, 32
          %s248 = scalar_lea.hbm %s1, %s247
          %s250 = sshll.u32 %s239, 4
          %s251 = int_to_ptr.vmem [resolvable:$true] %s250
          %253 = dma.hbm_to_vmem [thread:$0]  %s248, 32, %s251, %s236
        $region24: #{tpu_custom_call.1} parent=15 // pred_fallthru
          _
      $region16: #{tpu_custom_call.1} parent=5 // pred_fallthru
        _
      %p254 = scmp.le.s32.totalorder 1, %s17
      %p255 = scmp.lt.s32.totalorder %s17, 3
      %p256 = pnand %p254, %p255
      %p257 = pneg %p256
      // Predicated region
      $region25: #{tpu_custom_call.1} parent=5 // pred_check
        _
      $region26: #{tpu_custom_call.1} parent=5 // pred_check_branch
        %259 = sbr.rel (%p256) target = $region28
      $region27: #{tpu_custom_call.1} parent=5 // pred_region
        %s260 = ssub.s32 %s17, 1
        %s261 = sand.u32 %s57, 1
        %s262 = scalar_lea.sflag [#allocation6], %s261
        %s263 = sand.u32 %s57, 1
        %s264 = smul.addr %s263, 8
        %s265 = scalar_lea.vmem [#allocation5], %s264
        // Predicated region
        $region29: #{tpu_custom_call.1} parent=27 // pred_check
          %p266 = pneg %p70
        $region30: #{tpu_custom_call.1} parent=27 // pred_check_branch
          %268 = sbr.rel (%p266) target = $region32
        $region31: #{tpu_custom_call.1} parent=27 // pred_region
          %269 = dma.done %s262, 128
        $region32: #{tpu_custom_call.1} parent=27 // pred_fallthru
          _
        %s270 = sand.u32 %s91, 1
        %s271 = scalar_lea.sflag [#allocation8], %s270
        %s272 = sand.u32 %s91, 1
        %s273 = smul.addr %s272, 2
        %s274 = scalar_lea.vmem [#allocation7], %s273
        // Predicated region
        $region33: #{tpu_custom_call.1} parent=27 // pred_check
          %p275 = pneg %p104
        $region34: #{tpu_custom_call.1} parent=27 // pred_check_branch
          %277 = sbr.rel (%p275) target = $region36
        $region35: #{tpu_custom_call.1} parent=27 // pred_region
          %278 = dma.done %s271, 32
        $region36: #{tpu_custom_call.1} parent=27 // pred_fallthru
          _
        %s279 = sand.u32 %s57, 1
        %s280 = scalar_lea.sflag [#allocation6], %s279
        %s281 = sand.u32 %s57, 1
        %s282 = smul.addr %s281, 8
        %s283 = scalar_lea.vmem [#allocation5], %s282
        %p284 = pneg %p70
        %p285 = pneg %p67
        %s286 = sand.u32 %s91, 1
        %s287 = scalar_lea.sflag [#allocation8], %s286
        %s288 = sand.u32 %s91, 1
        %s289 = smul.addr %s288, 2
        %s290 = scalar_lea.vmem [#allocation7], %s289
        %p291 = pneg %p104
        %p292 = pneg %p101
        %p293 = pneg %p132
        %p294 = pneg %p129
        %p295 = scmp.lt.s32.totalorder %s27, 0
        %s296 = scalar_select %p295, %s27, 0
        %p297 = scmp.lt.s32.totalorder %s28, 1
        %s298 = scalar_select %p297, %s28, 1
        %s299 = smul.addr %s296, 2
        %s300 = sadd.s32 %s298, %s299
        %s301 = smul.addr %s300, 4
        %s302 = scalar_lea.vmem %s2, %s301
        %p303 = pneg %p160
        %p304 = pneg %p157
        %p305 = scmp.lt.s32.totalorder %s27, 0
        %s306 = scalar_select %p305, %s27, 0
        %p307 = scmp.lt.s32.totalorder %s28, 1
        %s308 = scalar_select %p307, %s28, 1
        %s309 = smul.addr %s306, 2
        %s310 = sadd.s32 %s308, %s309
        %s311 = smul.addr %s310, 4
        %s312 = scalar_lea.vmem %s3, %s311
        %p313 = pneg %p188
        %p314 = pneg %p185
        %p315 = scmp.lt.s32.totalorder %s27, 0
        %s316 = scalar_select %p315, %s27, 0
        %p317 = scmp.lt.s32.totalorder %s28, 1
        %s318 = scalar_select %p317, %s28, 1
        %s319 = smul.addr %s316, 2
        %s320 = sadd.s32 %s318, %s319
        %s321 = smul.addr %s320, 4
        %s322 = scalar_lea.vmem %s4, %s321
        %s323 = sadd.s32 %s27, %s29
        %p324 = scmp.lt.s32.totalorder %s323, 0
        %s325 = scalar_select %p324, %s323, 0
        %s326 = sadd.s32 %s27, %s29
        %p327 = scmp.lt.s32.totalorder %s326, 0
        %s328 = scalar_select %p327, %s326, 0
        %p329 = scmp.lt.s32.totalorder %s27, 0
        %s330 = scalar_select %p329, %s27, 0
        %p331 = scmp.lt.s32.totalorder %s28, 1
        %s332 = scalar_select %p331, %s28, 1
        %s333 = smul.addr %s330, 2
        %s334 = sadd.s32 %s332, %s333
        %s335 = smul.addr %s334, 4
        %s336 = scalar_lea.vmem %s2, %s335
        %p337 = scmp.lt.s32.totalorder %s27, 0
        %s338 = scalar_select %p337, %s27, 0
        %p339 = scmp.lt.s32.totalorder %s28, 1
        %s340 = scalar_select %p339, %s28, 1
        %s341 = smul.addr %s338, 2
        %s342 = sadd.s32 %s340, %s341
        %s343 = smul.addr %s342, 4
        %s344 = scalar_lea.vmem %s3, %s343
        %p345 = scmp.lt.s32.totalorder %s27, 0
        %s346 = scalar_select %p345, %s27, 0
        %p347 = scmp.lt.s32.totalorder %s28, 1
        %s348 = scalar_select %p347, %s28, 1
        %s349 = smul.addr %s346, 2
        %s350 = sadd.s32 %s348, %s349
        %s351 = smul.addr %s350, 4
        %s352 = scalar_lea.vmem %s4, %s351
        %p353 = scmp.eq.s32.totalorder %s29, 0
        // Predicated region
        $region37: #{tpu_custom_call.1} parent=27 // pred_check
          %p354 = pneg %p353
        $region38: #{tpu_custom_call.1} parent=27 // pred_check_branch
          %356 = sbr.rel (%p354) target = $region40
        $region39: #{tpu_custom_call.1} parent=27 // pred_region
          %357 = vst [vmem:[#allocation2] sm:$0xf] 0.0
          %358 = vst [vmem:[#allocation3] sm:$0xf] 0.0
          %359 = vst [vmem:[#allocation4] sm:$0xf] 0.0
        $region40: #{tpu_custom_call.1} parent=27 // pred_fallthru
          _
        %v360 = vld [vmem:[%s265] sm:$0x3]
        %v361 = vld [vmem:[%s265 + $0x2] sm:$0x3]
        %v362 = vld [vmem:[%s265 + $0x4] sm:$0x3]
        %v363 = vld [vmem:[%s265 + $0x6] sm:$0x3]
        %v364 = vld [vmem:[%s274] sm:$0x3]
        %vm365 = vcmp.eq.s32.totalorder %v364, 0
        %vm366 = vcmp.eq.s32.totalorder %v364, 1
        %vm367 = vcmp.eq.s32.totalorder %v364, 2
        %vm368 = vcmp.eq.s32.totalorder %v364, 3
        %v369 = vld [vmem:[#allocation2] sm:$0xf]
        %v370 = vsel %vm365, %v360, 0.0
        %v371 = vsel %vm366, %v361, 0.0
        %v372 = vsel %vm367, %v362, 0.0
        %v373 = vsel %vm368, %v363, 0.0
        %vm374 = vcmask 1041408
        %v375 = vsel %vm374, %v370, 0.0
        %v376 = vrot.slane %v375, 4
        %v377 = vadd.f32 %v375, %v376
        %v378 = vrot.slane %v377, 2
        %v379 = vadd.f32 %v377, %v378
        %v380 = vrot.slane %v379, 1
        %v381 = vadd.f32 %v379, %v380
        %v382 = vsel %vm374, %v371, 0.0
        %v383 = vrot.slane %v382, 4
        %v384 = vadd.f32 %v382, %v383
        %v385 = vrot.slane %v384, 2
        %v386 = vadd.f32 %v384, %v385
        %v387 = vrot.slane %v386, 1
        %v388 = vadd.f32 %v386, %v387
        %v389 = vsel %vm374, %v372, 0.0
        %v390 = vrot.slane %v389, 4
        %v391 = vadd.f32 %v389, %v390
        %v392 = vrot.slane %v391, 2
        %v393 = vadd.f32 %v391, %v392
        %v394 = vrot.slane %v393, 1
        %v395 = vadd.f32 %v393, %v394
        %v396 = vsel %vm374, %v373, 0.0
        %v397 = vrot.slane %v396, 4
        %v398 = vadd.f32 %v396, %v397
        %v399 = vrot.slane %v398, 2
        %v400 = vadd.f32 %v398, %v399
        %v401 = vrot.slane %v400, 1
        %v402 = vadd.f32 %v400, %v401
        %vm407 = vcmask 1041409
        %v408 = vsel %vm407, %v388, %v381
        %vm409 = vcmask 1042434
        %v410 = vsel %vm409, %v395, %v408
        %vm411 = vcmask 1043459
        %v412 = vsel %vm411, %v402, %v410
        %v414 = vadd.f32 %v369, %v412
        %415 = vst [vmem:[#allocation2] sm:$0xf] %v414
        %v416 = vld [vmem:[#allocation3] sm:$0xf]
        %v417 = vsel %vm374, %v360, 0.0
        %v418 = vrot.slane %v417, 4
        %v419 = vadd.f32 %v417, %v418
        %v420 = vrot.slane %v419, 2
        %v421 = vadd.f32 %v419, %v420
        %v422 = vrot.slane %v421, 1
        %v423 = vadd.f32 %v421, %v422
        %v424 = vsel %vm374, %v361, 0.0
        %v425 = vrot.slane %v424, 4
        %v426 = vadd.f32 %v424, %v425
        %v427 = vrot.slane %v426, 2
        %v428 = vadd.f32 %v426, %v427
        %v429 = vrot.slane %v428, 1
        %v430 = vadd.f32 %v428, %v429
        %v431 = vsel %vm374, %v362, 0.0
        %v432 = vrot.slane %v431, 4
        %v433 = vadd.f32 %v431, %v432
        %v434 = vrot.slane %v433, 2
        %v435 = vadd.f32 %v433, %v434
        %v436 = vrot.slane %v435, 1
        %v437 = vadd.f32 %v435, %v436
        %v438 = vsel %vm374, %v363, 0.0
        %v439 = vrot.slane %v438, 4
        %v440 = vadd.f32 %v438, %v439
        %v441 = vrot.slane %v440, 2
        %v442 = vadd.f32 %v440, %v441
        %v443 = vrot.slane %v442, 1
        %v444 = vadd.f32 %v442, %v443
        %v449 = vsel %vm407, %v430, %v423
        %v450 = vsel %vm409, %v437, %v449
        %v451 = vsel %vm411, %v444, %v450
        %v453 = vadd.f32 %v416, %v451
        %454 = vst [vmem:[#allocation3] sm:$0xf] %v453
        %v455 = vld [vmem:[#allocation4] sm:$0xf]
        %v456 = vsel %vm365, 1.0, 0.0
        %v457 = vsel %vm366, 1.0, 0.0
        %v458 = vsel %vm367, 1.0, 0.0
        %v459 = vsel %vm368, 1.0, 0.0
        %v460 = vsel %vm374, %v456, 0.0
        %v461 = vrot.slane %v460, 4
        %v462 = vadd.f32 %v460, %v461
        %v463 = vrot.slane %v462, 2
        %v464 = vadd.f32 %v462, %v463
        %v465 = vrot.slane %v464, 1
        %v466 = vadd.f32 %v464, %v465
        %v467 = vsel %vm374, %v457, 0.0
        %v468 = vrot.slane %v467, 4
        %v469 = vadd.f32 %v467, %v468
        %v470 = vrot.slane %v469, 2
        %v471 = vadd.f32 %v469, %v470
        %v472 = vrot.slane %v471, 1
        %v473 = vadd.f32 %v471, %v472
        %v474 = vsel %vm374, %v458, 0.0
        %v475 = vrot.slane %v474, 4
        %v476 = vadd.f32 %v474, %v475
        %v477 = vrot.slane %v476, 2
        %v478 = vadd.f32 %v476, %v477
        %v479 = vrot.slane %v478, 1
        %v480 = vadd.f32 %v478, %v479
        %v481 = vsel %vm374, %v459, 0.0
        %v482 = vrot.slane %v481, 4
        %v483 = vadd.f32 %v481, %v482
        %v484 = vrot.slane %v483, 2
        %v485 = vadd.f32 %v483, %v484
        %v486 = vrot.slane %v485, 1
        %v487 = vadd.f32 %v485, %v486
        %v492 = vsel %vm407, %v473, %v466
        %v493 = vsel %vm409, %v480, %v492
        %v494 = vsel %vm411, %v487, %v493
        %v496 = vadd.f32 %v455, %v494
        %497 = vst [vmem:[#allocation4] sm:$0xf] %v496
        // Predicated region
        $region41: #{tpu_custom_call.1} parent=27 // pred_check
          %p498 = pneg %p353
        $region42: #{tpu_custom_call.1} parent=27 // pred_check_branch
          %500 = sbr.rel (%p498) target = $region44
        $region43: #{tpu_custom_call.1} parent=27 // pred_region
          %v501 = vld [vmem:[#allocation2] sm:$0xf]
          %vm502 = vcmask 1043456
          %v503 = vsel %vm502, %v501, 0.0
          %504 = vadd.xlane.f32.xlu0 %v503
          %v505 = vpop.xlane.xlu0 %504
          %vm506 = vcmask 3072
          %507 = vst.msk [vmem:[%s336] sm:$0xf] %vm506, %v505
          %v508 = vld [vmem:[#allocation3] sm:$0xf]
          %v509 = vsel %vm502, %v508, 0.0
          %510 = vadd.xlane.f32.xlu0 %v509
          %v511 = vpop.xlane.xlu0 %510
          %512 = vst.msk [vmem:[%s344] sm:$0xf] %vm506, %v511
          %v513 = vld [vmem:[#allocation4] sm:$0xf]
          %v514 = vsel %vm502, %v513, 0.0
          %515 = vadd.xlane.f32.xlu0 %v514
          %v516 = vpop.xlane.xlu0 %515
          %517 = vst.msk [vmem:[%s352] sm:$0xf] %vm506, %v516
        $region44: #{tpu_custom_call.1} parent=27 // pred_fallthru
          _
        %p518 = scmp.lt.s32.totalorder %s27, 0
        %s519 = scalar_select %p518, %s27, 0
        %p520 = scmp.lt.s32.totalorder %s28, 1
        %s521 = scalar_select %p520, %s28, 1
        %s522 = smul.addr %s519, 2
        %s523 = sadd.s32 %s521, %s522
        %s524 = smul.addr %s523, 4
        %s525 = scalar_lea.vmem %s2, %s524
        %p526 = scmp.lt.s32.totalorder %s27, 0
        %s527 = scalar_select %p526, %s27, 0
        %p528 = scmp.lt.s32.totalorder %s28, 1
        %s529 = scalar_select %p528, %s28, 1
        %s530 = smul.addr %s527, 2
        %s531 = sadd.s32 %s529, %s530
        %s532 = smul.addr %s531, 4
        %s533 = scalar_lea.vmem %s3, %s532
        %p534 = scmp.lt.s32.totalorder %s27, 0
        %s535 = scalar_select %p534, %s27, 0
        %p536 = scmp.lt.s32.totalorder %s28, 1
        %s537 = scalar_select %p536, %s28, 1
        %s538 = smul.addr %s535, 2
        %s539 = sadd.s32 %s537, %s538
        %s540 = smul.addr %s539, 4
        %s541 = scalar_lea.vmem %s4, %s540
        // Predicated region
        $region45: #{tpu_custom_call.1} parent=27 // pred_check
          %p542 = pneg %p129
        $region46: #{tpu_custom_call.1} parent=27 // pred_check_branch
          %544 = sbr.rel (%p542) target = $region48
        $region47: #{tpu_custom_call.1} parent=27 // pred_region
          _
        $region48: #{tpu_custom_call.1} parent=27 // pred_fallthru
          _
        // Predicated region
        $region49: #{tpu_custom_call.1} parent=27 // pred_check
          %p545 = pneg %p157
        $region50: #{tpu_custom_call.1} parent=27 // pred_check_branch
          %547 = sbr.rel (%p545) target = $region52
        $region51: #{tpu_custom_call.1} parent=27 // pred_region
          _
        $region52: #{tpu_custom_call.1} parent=27 // pred_fallthru
          _
        // Predicated region
        $region53: #{tpu_custom_call.1} parent=27 // pred_check
          %p548 = pneg %p185
        $region54: #{tpu_custom_call.1} parent=27 // pred_check_branch
          %550 = sbr.rel (%p548) target = $region56
        $region55: #{tpu_custom_call.1} parent=27 // pred_region
          _
        $region56: #{tpu_custom_call.1} parent=27 // pred_fallthru
          _
      $region28: #{tpu_custom_call.1} parent=5 // pred_fallthru
        _
      %p551 = scmp.le.s32.totalorder 2, %s17
      // Predicated region
      $region57: #{tpu_custom_call.1} parent=5 // pred_check
        %p552 = pneg %p551
      $region58: #{tpu_custom_call.1} parent=5 // pred_check_branch
        %554 = sbr.rel (%p552) target = $region60
      $region59: #{tpu_custom_call.1} parent=5 // pred_region
        %s555 = ssub.s32 %s17, 2
        // Predicated region
        $region61: #{tpu_custom_call.1} parent=59 // pred_check
          %p556 = pneg %p135
        $region62: #{tpu_custom_call.1} parent=59 // pred_check_branch
          %558 = sbr.rel (%p556) target = $region64
        $region63: #{tpu_custom_call.1} parent=59 // pred_region
          %p559 = scmp.lt.s32.totalorder %s30, 0
          %s560 = scalar_select %p559, %s30, 0
          %p561 = scmp.lt.s32.totalorder %s31, 1
          %s562 = scalar_select %p561, %s31, 1
          %s563 = smul.addr %s560, 2
          %s564 = sadd.s32 %s562, %s563
          %s565 = smul.addr %s564, 4
          %s566 = scalar_lea.vmem %s2, %s565
        $region64: #{tpu_custom_call.1} parent=59 // pred_fallthru
          _
        // Predicated region
        $region65: #{tpu_custom_call.1} parent=59 // pred_check
          %p567 = pneg %p163
        $region66: #{tpu_custom_call.1} parent=59 // pred_check_branch
          %569 = sbr.rel (%p567) target = $region68
        $region67: #{tpu_custom_call.1} parent=59 // pred_region
          %p570 = scmp.lt.s32.totalorder %s30, 0
          %s571 = scalar_select %p570, %s30, 0
          %p572 = scmp.lt.s32.totalorder %s31, 1
          %s573 = scalar_select %p572, %s31, 1
          %s574 = smul.addr %s571, 2
          %s575 = sadd.s32 %s573, %s574
          %s576 = smul.addr %s575, 4
          %s577 = scalar_lea.vmem %s3, %s576
        $region68: #{tpu_custom_call.1} parent=59 // pred_fallthru
          _
        // Predicated region
        $region69: #{tpu_custom_call.1} parent=59 // pred_check
          %p578 = pneg %p191
        $region70: #{tpu_custom_call.1} parent=59 // pred_check_branch
          %580 = sbr.rel (%p578) target = $region72
        $region71: #{tpu_custom_call.1} parent=59 // pred_region
          %p581 = scmp.lt.s32.totalorder %s30, 0
          %s582 = scalar_select %p581, %s30, 0
          %p583 = scmp.lt.s32.totalorder %s31, 1
          %s584 = scalar_select %p583, %s31, 1
          %s585 = smul.addr %s582, 2
          %s586 = sadd.s32 %s584, %s585
          %s587 = smul.addr %s586, 4
          %s588 = scalar_lea.vmem %s4, %s587
        $region72: #{tpu_custom_call.1} parent=59 // pred_fallthru
          _
      $region60: #{tpu_custom_call.1} parent=5 // pred_fallthru
        _
    $region6: #{tpu_custom_call.1} parent=1 // loop_footer
      %s21 = sadd.s32 1, %s17
    $region7: #{tpu_custom_call.1} parent=1 // loop_footer_branch
      %16 = sbr.rel target = $region3
    $region8: #{tpu_custom_call.1} parent=1 // loop_exit
      _
    %589 = vsyncpa [#allocation6], 1
    %s590 = scalar_lea.sflag [#allocation6], 1
    %591 = vsyncpa %s590, 1
    %592 = vsyncpa [#allocation8], 1
    %s593 = scalar_lea.sflag [#allocation8], 1
    %594 = vsyncpa %s593, 1

</llo_original>
